<compile_context>
chip_gen: v5e
topology: v5e:2x2
jax: 0.10.0
libtpu: 0.0.40
codegen_flags: <defaults>
</compile_context>

<pallas_src>
import math

import jax
import jax.numpy as jnp
from jax.experimental import pallas as pl
from jax.experimental.pallas import tpu as pltpu


LANE = 128
NODE_ALIGN = 256  # node-dim padding granularity, independent of the tile size


def _round_up(x, m):
    return ((x + m - 1) // m) * m


def _gcn_fused_kernel(adj_ref, x_ref, w_ref, b_ref, o_ref):
    """One (row-tile i, k-tile) step of  out = adj @ (x @ W) + bias.

    Stage-1 (support = x @ W) is fused: the k-th x row tile is multiplied by
    the resident weight block and fed straight to the adj matmul, so no
    [N, Fp] support intermediate ever touches HBM.  The f32 output block is
    resident over k (accumulator pattern): initialized with the bias at
    k == 0 and accumulated into in place (no scratch, no finalize copy).
    """
    k = pl.program_id(1)

    # support tile: (T, F_in) @ (F_in, Fp) -> (T, Fp), f32 MXU accumulation,
    # then cast to the adj stream dtype (native bf16 MXU on the bf16 path).
    s = jnp.dot(x_ref[...], w_ref[...], preferred_element_type=jnp.float32)
    s = s.astype(adj_ref.dtype)

    @pl.when(k == 0)
    def _():
        # Bias added exactly once via the accumulator init (post-aggregation
        # semantics preserved: out = bias + sum_k adj_k @ s_k).
        o_ref[...] = jnp.broadcast_to(b_ref[...], o_ref.shape)

    o_ref[...] += jnp.dot(adj_ref[...], s, preferred_element_type=jnp.float32)


def _estimate_vmem_bytes(T, F_in, Fp, adj_bytes):
    """Conservative double-buffered VMEM working-set estimate per grid step."""
    return (
        2 * T * T * adj_bytes  # adj tile (dominant stream)
        + 2 * T * F_in * 4     # x row tile (f32)
        + 2 * F_in * Fp * 4    # resident weight (f32)
        + 2 * Fp * 4           # bias row
        + 2 * T * Fp * 4       # resident f32 output block
    )


def graph_convolution(
    x,
    adj,
    weight,
    bias,
    *,
    adj_dtype=jnp.float32,
    tile=None,
    vmem_budget_bytes=40 * 1024 * 1024,  # v7x-safe (64 MiB/TC); fine on v5e/v6e
):
    """GCN layer forward.

    x:      [N, F_in]   node features
    adj:    [N, N]      (dense, row-normalized) adjacency
    weight: [F_in, F_out]
    bias:   [F_out] or None
    adj_dtype: dtype of the streamed adjacency (jnp.bfloat16 halves the
               dominant HBM read; x/W stay f32, accumulation stays f32).
    Returns float32 [N, F_out].
    """
    N, F_in = x.shape
    F_out = weight.shape[1]
    f32 = jnp.float32

    Fp = _round_up(max(F_out, LANE), LANE)        # lane-dense output width
    Np = _round_up(N, NODE_ALIGN)                 # padding decoupled from tile
    adj_bytes = jnp.dtype(adj_dtype).itemsize

    # ---- tile selection -----------------------------------------------------
    # Candidates: multiples of 128 that divide Np, capped at Np/2 so at least
    # two row tiles exist (keeps both v7x TensorCores busy), and filtered by
    # the double-buffered VMEM budget.
    tile_target = tile if tile is not None else (2048 if adj_bytes < 4 else 1024)
    max_t = max(LANE, Np // 2)
    cands = [d for d in range(LANE, Np + 1, LANE) if Np % d == 0 and d <= max_t]
    good = [
        d
        for d in cands
        if d <= tile_target
        and _estimate_vmem_bytes(d, F_in, Fp, adj_bytes) <= vmem_budget_bytes
    ]
    T = max(good) if good else min(cands)
    n_tiles = Np // T

    est = _estimate_vmem_bytes(T, F_in, Fp, adj_bytes)
    vmem_limit = min(max(vmem_budget_bytes, int(1.25 * est)), 127 * 1024 * 1024)

    # ---- inputs: avoid padded/cast HBM copies whenever possible -------------
    if Np == N and adj.dtype == adj_dtype:
        adj_in = adj                                   # no copy of the N^2 stream
    elif Np == N:
        adj_in = adj.astype(adj_dtype)                 # one-shot cast (reuse across layers)
    else:
        adj_in = jnp.zeros((Np, Np), adj_dtype).at[:N, :N].set(adj.astype(adj_dtype))

    if Np == N and x.dtype == f32:
        x_in = x
    elif Np == N:
        x_in = x.astype(f32)
    else:
        x_in = jnp.zeros((Np, F_in), f32).at[:N, :].set(x.astype(f32))

    if Fp == F_out and weight.dtype == f32:
        w_in = weight
    else:
        w_in = jnp.zeros((F_in, Fp), f32).at[:, :F_out].set(weight.astype(f32))

    if bias is None:
        b_in = jnp.zeros((1, Fp), f32)
    else:
        b_in = jnp.zeros((1, Fp), f32).at[0, :F_out].set(bias.astype(f32))

    # ---- fused kernel: out = adj @ (x @ W) + bias ----------------------------
    out_p = pl.pallas_call(
        _gcn_fused_kernel,
        out_shape=jax.ShapeDtypeStruct((Np, Fp), jnp.float32),
        grid=(n_tiles, n_tiles),
        in_specs=[
            pl.BlockSpec((T, T), lambda i, k: (i, k)),      # adj tile (streamed)
            pl.BlockSpec((T, F_in), lambda i, k: (k, 0)),   # x row tile for this k
            pl.BlockSpec((F_in, Fp), lambda i, k: (0, 0)),  # weight (resident)
            pl.BlockSpec((1, Fp), lambda i, k: (0, 0)),     # bias (resident)
        ],
        out_specs=pl.BlockSpec((T, Fp), lambda i, k: (i, 0)),  # resident over k
        compiler_params=pltpu.CompilerParams(
            dimension_semantics=("parallel", "arbitrary"),
            vmem_limit_bytes=vmem_limit,
        ),
    )(adj_in, x_in, w_in, b_in)

    return out_p[:N, :F_out]


if __name__ == "__main__":
    # Module config (small, deterministic init as in reset_parameters()).
    N = 256
    in_features = 64
    out_features = 32

    key = jax.random.PRNGKey(0)
    k_x, k_adj, k_w, k_b = jax.random.split(key, 4)

    # Parameters: uniform(-stdv, stdv), stdv = 1/sqrt(out_features)
    stdv = 1.0 / math.sqrt(out_features)
    weight = jax.random.uniform(
        k_w, (in_features, out_features), jnp.float32, minval=-stdv, maxval=stdv
    )
    bias = jax.random.uniform(
        k_b, (out_features,), jnp.float32, minval=-stdv, maxval=stdv
    )

    # Inputs: node features and a row-normalized (dense) adjacency matrix.
    x = jax.random.uniform(k_x, (N, in_features), jnp.float32)
    a_raw = (jax.random.uniform(k_adj, (N, N), jnp.float32) > 0.9).astype(jnp.float32)
    a_raw = a_raw + jnp.eye(N, dtype=jnp.float32)        # self-loops
    adj = a_raw / jnp.sum(a_raw, axis=1, keepdims=True)  # row-normalize

    # Plain-JAX reference (matches the PyTorch module's forward).
    ref = adj @ (x @ weight) + bias[None, :]

    # f32 path (module-exact numerics); tile=128 exercises the multi-k
    # accumulator / pl.when init path even on this small graph.
    out_f32 = jax.block_until_ready(
        graph_convolution(x, adj, weight, bias, tile=128)
    )
    assert out_f32.shape == (N, out_features)
    assert jnp.allclose(out_f32, ref, atol=1e-4, rtol=1e-4), "f32 mismatch vs reference"

    # bf16 adj stream (halves the dominant HBM read); x/W stay f32, support is
    # cast to bf16 only at the adj matmul, f32 MXU accumulation.
    out_bf16 = jax.block_until_ready(
        graph_convolution(x, adj, weight, bias, adj_dtype=jnp.bfloat16)
    )
    assert out_bf16.shape == (N, out_features)
    assert jnp.allclose(out_bf16, ref, atol=3e-2, rtol=3e-2), "bf16 mismatch vs reference"

    # Ragged N (exercises the zero-padding path) with bias=None.
    N2 = 200
    x2 = x[:N2]
    a2 = a_raw[:N2, :N2]
    adj2 = a2 / jnp.sum(a2, axis=1, keepdims=True)
    ref2 = adj2 @ (x2 @ weight)
    out2 = jax.block_until_ready(graph_convolution(x2, adj2, weight, None))
    assert out2.shape == (N2, out_features)
    assert jnp.allclose(out2, ref2, atol=1e-4, rtol=1e-4), "ragged/no-bias mismatch"

    print("KERNEL_OK")
</pallas_src>

<mosaic_0001>
module attributes {stable_mosaic.version = 11 : i64} {
  func.func @_gcn_fused_kernel(%arg0: i32, %arg1: i32, %arg2: memref<128x128xf32, #tpu.memory_space<vmem>>, %arg3: memref<128x64xf32, #tpu.memory_space<vmem>>, %arg4: memref<64x128xf32, #tpu.memory_space<vmem>>, %arg5: memref<1x128xf32, #tpu.memory_space<vmem>>, %arg6: memref<128x128xf32, #tpu.memory_space<vmem>>) attributes {dimension_semantics = [#tpu.dimension_semantics<parallel>, #tpu.dimension_semantics<arbitrary>], iteration_bounds = array<i64: 2, 2>, scalar_prefetch = 0 : i64, scratch_operands = 0 : i64, tpu.core_type = #tpu.core_type<tc>, window_params = [{transform_indices = @transform_0, window_bounds = array<i64: 128, 128>}, {transform_indices = @transform_1, window_bounds = array<i64: 128, 64>}, {pipeline_mode = #tpu.pipeline_mode<synchronous>, transform_indices = @transform_2, window_bounds = array<i64: 64, 128>}, {pipeline_mode = #tpu.pipeline_mode<synchronous>, transform_indices = @transform_3, window_bounds = array<i64: 1, 128>}, {transform_indices = @transform_4, window_bounds = array<i64: 128, 128>}]} {
    %c0 = arith.constant 0 : index
    %c0_0 = arith.constant 0 : index
    %0 = vector.load %arg3[%c0, %c0_0] : memref<128x64xf32, #tpu.memory_space<vmem>>, vector<128x64xf32>
    %c0_1 = arith.constant 0 : index
    %c0_2 = arith.constant 0 : index
    %1 = vector.load %arg4[%c0_1, %c0_2] : memref<64x128xf32, #tpu.memory_space<vmem>>, vector<64x128xf32>
    %cst = arith.constant dense<0.000000e+00> : vector<128x128xf32>
    %2 = tpu.matmul %0, %1, %cst {dimension_numbers = #tpu.dot_dimension_numbers<[1], [0], [0], [1], [0, 0, 1, 1], [], []>} : vector<128x64xf32>, vector<64x128xf32>, vector<128x128xf32> -> vector<128x128xf32>
    %c0_i32 = arith.constant 0 : i32
    %3 = arith.cmpi eq, %arg1, %c0_i32 : i32
    %4 = arith.extui %3 : i1 to i32
    %c0_i32_3 = arith.constant 0 : i32
    %5 = arith.cmpi ne, %4, %c0_i32_3 : i32
    scf.if %5 {
      %c0_11 = arith.constant 0 : index
      %c0_12 = arith.constant 0 : index
      %11 = vector.load %arg5[%c0_11, %c0_12] : memref<1x128xf32, #tpu.memory_space<vmem>>, vector<1x128xf32>
      %12 = vector.shape_cast %11 : vector<1x128xf32> to vector<1x128xf32>
      %13 = vector.broadcast %12 : vector<1x128xf32> to vector<128x128xf32>
      %c0_13 = arith.constant 0 : index
      %c0_14 = arith.constant 0 : index
      %14 = vector.load %arg6[%c0_13, %c0_14] : memref<128x128xf32, #tpu.memory_space<vmem>>, vector<128x128xf32>
      tpu.vector_store %arg6[%c0_13, %c0_14], %13 {strides = array<i32>} : memref<128x128xf32, #tpu.memory_space<vmem>>, vector<128x128xf32>,
    } else {
    }
    %c0_4 = arith.constant 0 : index
    %c0_5 = arith.constant 0 : index
    %6 = vector.load %arg6[%c0_4, %c0_5] : memref<128x128xf32, #tpu.memory_space<vmem>>, vector<128x128xf32>
    %c0_6 = arith.constant 0 : index
    %c0_7 = arith.constant 0 : index
    %7 = vector.load %arg2[%c0_6, %c0_7] : memref<128x128xf32, #tpu.memory_space<vmem>>, vector<128x128xf32>
    %cst_8 = arith.constant dense<0.000000e+00> : vector<128x128xf32>
    %8 = tpu.matmul %7, %2, %cst_8 {dimension_numbers = #tpu.dot_dimension_numbers<[1], [0], [0], [1], [0, 0, 1, 1], [], []>} : vector<128x128xf32>, vector<128x128xf32>, vector<128x128xf32> -> vector<128x128xf32>
    %9 = arith.addf %6, %8 : vector<128x128xf32>
    %c0_9 = arith.constant 0 : index
    %c0_10 = arith.constant 0 : index
    %10 = vector.load %arg6[%c0_9, %c0_10] : memref<128x128xf32, #tpu.memory_space<vmem>>, vector<128x128xf32>
    tpu.vector_store %arg6[%c0_9, %c0_10], %9 {strides = array<i32>} : memref<128x128xf32, #tpu.memory_space<vmem>>, vector<128x128xf32>,
    return
  }
  func.func @transform_0(%arg0: i32, %arg1: i32) -> (i32, i32) {
    %c0_i32 = arith.constant 0 : i32
    return %arg0, %arg1 : i32, i32
  }
  func.func @transform_1(%arg0: i32, %arg1: i32) -> (i32, i32) {
    %c0_i32 = arith.constant 0 : i32
    %c0_i32_0 = arith.constant 0 : i32
    return %arg1, %c0_i32 : i32, i32
  }
  func.func @transform_2(%arg0: i32, %arg1: i32) -> (i32, i32) {
    %c0_i32 = arith.constant 0 : i32
    %c0_i32_0 = arith.constant 0 : i32
    %c0_i32_1 = arith.constant 0 : i32
    return %c0_i32, %c0_i32_0 : i32, i32
  }
  func.func @transform_3(%arg0: i32, %arg1: i32) -> (i32, i32) {
    %c0_i32 = arith.constant 0 : i32
    %c0_i32_0 = arith.constant 0 : i32
    %c0_i32_1 = arith.constant 0 : i32
    return %c0_i32, %c0_i32_0 : i32, i32
  }
  func.func @transform_4(%arg0: i32, %arg1: i32) -> (i32, i32) {
    %c0_i32 = arith.constant 0 : i32
    %c0_i32_0 = arith.constant 0 : i32
    return %arg0, %c0_i32 : i32, i32
  }
}

</mosaic_0001>

<llo_original>
// kernel: tpu_custom_call.1
$region0: #{tpu_custom_call.1}
  #allocation0 [shape = 'u32[]', space=smem, size = 0x4, offset = 0x4, fixed_abs, tag = 'smem constant byte address 0x4 - core index']
  #allocation1 [shape = 'u32[72,128]{1,0:T(1,128)}', space=vmem, size = 0x9000, scoped, tag = 'internal scratch']
  %s0 = inlined_call_operand.hbm [shape: f32[256,256], index: 0, kind: input, shape index: {}]
  %s1 = inlined_call_operand.vmem [shape: f32[256,64], index: 1, kind: input, shape index: {}]
  %s2 = inlined_call_operand.vmem [shape: f32[64,128], index: 2, kind: input, shape index: {}]
  %s3 = inlined_call_operand.vmem [shape: f32[1,128], index: 3, kind: input, shape index: {}]
  %s4 = inlined_call_operand.hbm [shape: f32[256,128], index: 4, kind: output, shape index: {}]
  %s5 = sld [smem:[#allocation0]]
  $region57: #{tpu_custom_call.1} parent=0
    _
  %s7 = ssub.s32 1, %s5
  %s8 = scalar_select 0, %s7, %s5
  $region1: #{tpu_custom_call.1} parent=0
    #allocation2 [shape = 'u8[131072]{0}', space=vmem, size = 0x20000, scoped, tag = 'input window, operand 0']
    #allocation3 [shape = 's32[2]{0}', space=sflag, size = 0x8, scoped, tag = 'scoped memory for tpu_custom_call.1']
    #allocation4 [shape = 's32[2]{0}', space=sflag, size = 0x8, scoped, tag = 'scoped memory for tpu_custom_call.1']
    #allocation5 [shape = 'u8[131072]{0}', space=vmem, size = 0x20000, scoped, tag = 'output window, operand 0']
    %9 = vsyncpa [#allocation3], 0
    %s10 = scalar_lea.sflag [#allocation3], 1
    %11 = vsyncpa %s10, 0
    %12 = vsyncpa [#allocation4], 0
    %s13 = scalar_lea.sflag [#allocation4], 1
    %14 = vsyncpa %s13, 0
    loop: start=0, step=1, limit=6
    $region2: #{tpu_custom_call.1} parent=1 // loop_pre_header
      _
    $region3: #{tpu_custom_call.1} parent=1 // loop_header
      %s16 = sphi 0, %s20
      %p17 = scmp.ge.s32.totalorder %s16, 6
      %s23 = sphi 0, %s35
      %s24 = sphi 0, %s31
      %s25 = sphi 0, %s23
      %s26 = sphi 0, %s24
      %s27 = sphi 0, %s25
      %s28 = sphi 0, %s26
      %s40 = sphi 0, %s42
      %s43 = sphi 0, %s40
      %s44 = sphi 0, %s43
      %s60 = sphi 0, %s44
      %s66 = sphi 0, %s68
      %s69 = sphi 0, %s66
      %s70 = sphi 0, %s69
      %s86 = sphi 0, %s70
      %s90 = sphi 0, %s90
      %s92 = sphi 0, %s90
      %s93 = sphi 0, %s92
      %s107 = sphi 0, %s93
      %s111 = sphi 0, %s111
      %s113 = sphi 0, %s111
      %s114 = sphi 0, %s113
      %s128 = sphi 0, %s114
      %s134 = sphi 0, %s136
      %s137 = sphi 0, %s134
      %s138 = sphi 0, %s137
      %s154 = sphi 0, %s138
    $region4: #{tpu_custom_call.1} parent=1 // loop_header_branch
      %19 = sbr.rel (%p17) target = $region8
    $region5: #{tpu_custom_call.1} parent=1 // loop_body
      %s21 = ssub.s32 %s16, 1
      %s22 = ssub.s32 %s16, 2
      %s29 = sadd.s32 1, %s24
      %p30 = scmp.ge.s32.totalorder %s29, 2
      %s31 = scalar_select %p30, 0, %s29
      %s32 = sadd.s32 1, %s23
      %s33 = scalar_select %p30, %s32, %s23
      %p34 = scmp.ge.s32.totalorder %s33, 2
      %s35 = scalar_select %p34, 0, %s33
      %s36 = ssub.s32 %s23, %s35
      %s37 = ssub.s32 %s24, %s31
      %s38 = sor.u32 %s36, %s37
      %p39 = scmp.eq.s32.totalorder %s38, 0
      %s41 = sadd.s32 %s40, 1
      %s42 = scalar_select %p39, %s40, %s41
      %p45 = pneg %p39
      %p46 = scmp.eq.s32.totalorder %s16, 3
      %p47 = por %p45, %p46
      %p48 = scmp.ne.s32.totalorder %s40, %s43
      %p49 = scmp.eq.s32.totalorder %s16, 0
      %p50 = por %p48, %p49
      %p51 = scmp.ne.s32.totalorder %s40, %s43
      %p52 = scmp.eq.s32.totalorder %s21, 3
      %p53 = por %p51, %p52
      %p54 = scmp.ne.s32.totalorder %s43, %s44
      %p55 = scmp.eq.s32.totalorder %s21, 0
      %p56 = por %p54, %p55
      %p57 = scmp.ne.s32.totalorder %s43, %s44
      %p58 = scmp.eq.s32.totalorder %s22, 3
      %p59 = por %p57, %p58
      %p61 = scmp.ne.s32.totalorder %s44, %s60
      %p62 = scmp.eq.s32.totalorder %s22, 0
      %p63 = por %p61, %p62
      %s64 = ssub.s32 %s24, %s31
      %p65 = scmp.eq.s32.totalorder %s64, 0
      %s67 = sadd.s32 %s66, 1
      %s68 = scalar_select %p65, %s66, %s67
      %p71 = pneg %p65
      %p72 = scmp.eq.s32.totalorder %s16, 3
      %p73 = por %p71, %p72
      %p74 = scmp.ne.s32.totalorder %s66, %s69
      %p75 = scmp.eq.s32.totalorder %s16, 0
      %p76 = por %p74, %p75
      %p77 = scmp.ne.s32.totalorder %s66, %s69
      %p78 = scmp.eq.s32.totalorder %s21, 3
      %p79 = por %p77, %p78
      %p80 = scmp.ne.s32.totalorder %s69, %s70
      %p81 = scmp.eq.s32.totalorder %s21, 0
      %p82 = por %p80, %p81
      %p83 = scmp.ne.s32.totalorder %s69, %s70
      %p84 = scmp.eq.s32.totalorder %s22, 3
      %p85 = por %p83, %p84
      %p87 = scmp.ne.s32.totalorder %s70, %s86
      %p88 = scmp.eq.s32.totalorder %s22, 0
      %p89 = por %p87, %p88
      %s91 = sadd.s32 %s90, 1
      %p94 = scmp.eq.s32.totalorder %s16, 3
      %p95 = scmp.ne.s32.totalorder %s90, %s92
      %p96 = scmp.eq.s32.totalorder %s16, 0
      %p97 = por %p95, %p96
      %p98 = scmp.ne.s32.totalorder %s90, %s92
      %p99 = scmp.eq.s32.totalorder %s21, 3
      %p100 = por %p98, %p99
      %p101 = scmp.ne.s32.totalorder %s92, %s93
      %p102 = scmp.eq.s32.totalorder %s21, 0
      %p103 = por %p101, %p102
      %p104 = scmp.ne.s32.totalorder %s92, %s93
      %p105 = scmp.eq.s32.totalorder %s22, 3
      %p106 = por %p104, %p105
      %p108 = scmp.ne.s32.totalorder %s93, %s107
      %p109 = scmp.eq.s32.totalorder %s22, 0
      %p110 = por %p108, %p109
      %s112 = sadd.s32 %s111, 1
      %p115 = scmp.eq.s32.totalorder %s16, 3
      %p116 = scmp.ne.s32.totalorder %s111, %s113
      %p117 = scmp.eq.s32.totalorder %s16, 0
      %p118 = por %p116, %p117
      %p119 = scmp.ne.s32.totalorder %s111, %s113
      %p120 = scmp.eq.s32.totalorder %s21, 3
      %p121 = por %p119, %p120
      %p122 = scmp.ne.s32.totalorder %s113, %s114
      %p123 = scmp.eq.s32.totalorder %s21, 0
      %p124 = por %p122, %p123
      %p125 = scmp.ne.s32.totalorder %s113, %s114
      %p126 = scmp.eq.s32.totalorder %s22, 3
      %p127 = por %p125, %p126
      %p129 = scmp.ne.s32.totalorder %s114, %s128
      %p130 = scmp.eq.s32.totalorder %s22, 0
      %p131 = por %p129, %p130
      %s132 = ssub.s32 %s23, %s35
      %p133 = scmp.eq.s32.totalorder %s132, 0
      %s135 = sadd.s32 %s134, 1
      %s136 = scalar_select %p133, %s134, %s135
      %p139 = pneg %p133
      %p140 = scmp.eq.s32.totalorder %s16, 3
      %p141 = por %p139, %p140
      %p142 = scmp.ne.s32.totalorder %s134, %s137
      %p143 = scmp.eq.s32.totalorder %s16, 0
      %p144 = por %p142, %p143
      %p145 = scmp.ne.s32.totalorder %s134, %s137
      %p146 = scmp.eq.s32.totalorder %s21, 3
      %p147 = por %p145, %p146
      %p148 = scmp.ne.s32.totalorder %s137, %s138
      %p149 = scmp.eq.s32.totalorder %s21, 0
      %p150 = por %p148, %p149
      %p151 = scmp.ne.s32.totalorder %s137, %s138
      %p152 = scmp.eq.s32.totalorder %s22, 3
      %p153 = por %p151, %p152
      %p155 = scmp.ne.s32.totalorder %s138, %s154
      %p156 = scmp.eq.s32.totalorder %s22, 0
      %p157 = por %p155, %p156
      %p158 = scmp.le.s32.totalorder 1, %s16
      %p159 = scmp.lt.s32.totalorder %s16, 5
      %p160 = pnand %p158, %p159
      %p161 = pneg %p160
      // Predicated region
      $region9: #{tpu_custom_call.1} parent=5 // pred_check
        _
      $region10: #{tpu_custom_call.1} parent=5 // pred_check_branch
        %163 = sbr.rel (%p160) target = $region12
      $region11: #{tpu_custom_call.1} parent=5 // pred_region
        %s164 = ssub.s32 %s16, 1
        // Predicated region
        $region13: #{tpu_custom_call.1} parent=11 // pred_check
          %p165 = pneg %p103
        $region14: #{tpu_custom_call.1} parent=11 // pred_check_branch
          %167 = sbr.rel (%p165) target = $region16
        $region15: #{tpu_custom_call.1} parent=11 // pred_region
          _
        $region16: #{tpu_custom_call.1} parent=11 // pred_fallthru
          _
        // Predicated region
        $region17: #{tpu_custom_call.1} parent=11 // pred_check
          %p168 = pneg %p124
        $region18: #{tpu_custom_call.1} parent=11 // pred_check_branch
          %170 = sbr.rel (%p168) target = $region20
        $region19: #{tpu_custom_call.1} parent=11 // pred_region
          _
        $region20: #{tpu_custom_call.1} parent=11 // pred_fallthru
          _
      $region12: #{tpu_custom_call.1} parent=5 // pred_fallthru
        _
      %p171 = scmp.lt.s32.totalorder %s16, 4
      // Predicated region
      $region21: #{tpu_custom_call.1} parent=5 // pred_check
        %p172 = pneg %p171
      $region22: #{tpu_custom_call.1} parent=5 // pred_check_branch
        %174 = sbr.rel (%p172) target = $region24
      $region23: #{tpu_custom_call.1} parent=5 // pred_region
        // Predicated region
        $region25: #{tpu_custom_call.1} parent=23 // pred_check
          %p175 = pneg %p50
        $region26: #{tpu_custom_call.1} parent=23 // pred_check_branch
          %177 = sbr.rel (%p175) target = $region28
        $region27: #{tpu_custom_call.1} parent=23 // pred_region
          %s178 = sand.u32 %s40, 1
          %s179 = scalar_lea.sflag [#allocation3], %s178
          %s180 = sand.u32 %s40, 1
          %s181 = smul.addr %s180, 128
          %s182 = scalar_lea.vmem [#allocation2], %s181
          %s183 = smul.u32 16, %s23
          %185 = vsyncadd %s179, 0
          %s186 = smul.addr %s183, 2
          %s187 = sadd.s32 %s24, %s186
          %s188 = smul.addr %s187, 8
          %s189 = scalar_lea.hbm %s0, %s188
          %s190 = sshll.u32 %s189, 4
          %s191 = int_to_ptr.hbm [resolvable:$true] %s190
          %s192 = sshll.u32 %s182, 4
          %s193 = int_to_ptr.vmem [resolvable:$true] %s192
          %198 = dma.hbm_to_vmem [thread:$0]  %s191, 2048, %s193, %s179, 256, 128, 8
        $region28: #{tpu_custom_call.1} parent=23 // pred_fallthru
          _
        // Predicated region
        $region29: #{tpu_custom_call.1} parent=23 // pred_check
          %p199 = pneg %p76
        $region30: #{tpu_custom_call.1} parent=23 // pred_check_branch
          %201 = sbr.rel (%p199) target = $region32
        $region31: #{tpu_custom_call.1} parent=23 // pred_region
          %s202 = smul.u32 16, %s24
          %p203 = scmp.lt.s32.totalorder %s202, 31
          %s204 = scalar_select %p203, %s202, 31
          %s205 = smul.addr %s204, 8
          %s206 = scalar_lea.vmem %s1, %s205
          %s207 = smul.u32 16, %s24
        $region32: #{tpu_custom_call.1} parent=23 // pred_fallthru
          _
      $region24: #{tpu_custom_call.1} parent=5 // pred_fallthru
        _
      %p208 = scmp.le.s32.totalorder 1, %s16
      %p209 = scmp.lt.s32.totalorder %s16, 5
      %p210 = pnand %p208, %p209
      %p211 = pneg %p210
      // Predicated region
      $region33: #{tpu_custom_call.1} parent=5 // pred_check
        _
      $region34: #{tpu_custom_call.1} parent=5 // pred_check_branch
        %213 = sbr.rel (%p210) target = $region36
      $region35: #{tpu_custom_call.1} parent=5 // pred_region
        %s214 = ssub.s32 %s16, 1
        %s215 = sand.u32 %s43, 1
        %s216 = scalar_lea.sflag [#allocation3], %s215
        %s217 = sand.u32 %s43, 1
        %s218 = smul.addr %s217, 128
        %s219 = scalar_lea.vmem [#allocation2], %s218
        // Predicated region
        $region37: #{tpu_custom_call.1} parent=35 // pred_check
          %p220 = pneg %p56
        $region38: #{tpu_custom_call.1} parent=35 // pred_check_branch
          %222 = sbr.rel (%p220) target = $region40
        $region39: #{tpu_custom_call.1} parent=35 // pred_region
          %224 = dma.done %s216, 2048
        $region40: #{tpu_custom_call.1} parent=35 // pred_fallthru
          _
        %s225 = sand.u32 %s43, 1
        %s226 = scalar_lea.sflag [#allocation3], %s225
        %s227 = sand.u32 %s43, 1
        %s228 = smul.addr %s227, 128
        %s229 = scalar_lea.vmem [#allocation2], %s228
        %p230 = pneg %p56
        %p231 = pneg %p53
        %s232 = smul.u32 16, %s26
        %p233 = scmp.lt.s32.totalorder %s232, 31
        %s234 = scalar_select %p233, %s232, 31
        %s235 = smul.addr %s234, 8
        %s236 = scalar_lea.vmem %s1, %s235
        %p237 = pneg %p82
        %p238 = pneg %p79
        %p239 = pneg %p103
        %p240 = pneg %p100
        %p241 = pneg %p124
        %p242 = pneg %p121
        %p243 = pneg %p150
        %p244 = pneg %p147
        %s245 = sand.u32 %s137, 1
        %s246 = scalar_lea.sflag [#allocation4], %s245
        %s247 = sand.u32 %s137, 1
        %s248 = smul.addr %s247, 128
        %s249 = scalar_lea.vmem [#allocation5], %s248
        %s250 = smul.u32 16, %s25
        %s251 = smul.u32 16, %s26
        %p252 = scmp.lt.s32.totalorder %s251, 31
        %s253 = scalar_select %p252, %s251, 31
        %s254 = smul.addr %s253, 8
        %s255 = scalar_lea.vmem %s1, %s254
        %s256 = smul.u32 16, %s26
        %s257 = smul.u32 16, %s25
        %v258 = vld [vmem:[%s255] sm:$0xff]
        %v259 = vld [vmem:[%s255 + $0x8] sm:$0xff]
        %v260 = vld [vmem:[%s255 + $0x10] sm:$0xff]
        %v261 = vld [vmem:[%s255 + $0x18] sm:$0xff]
        %v262 = vld [vmem:[%s255 + $0x20] sm:$0xff]
        %v263 = vld [vmem:[%s255 + $0x28] sm:$0xff]
        %v264 = vld [vmem:[%s255 + $0x30] sm:$0xff]
        %v265 = vld [vmem:[%s255 + $0x38] sm:$0xff]
        %v266 = vld [vmem:[%s255 + $0x40] sm:$0xff]
        %v267 = vld [vmem:[%s255 + $0x48] sm:$0xff]
        %v268 = vld [vmem:[%s255 + $0x50] sm:$0xff]
        %v269 = vld [vmem:[%s255 + $0x58] sm:$0xff]
        %v270 = vld [vmem:[%s255 + $0x60] sm:$0xff]
        %v271 = vld [vmem:[%s255 + $0x68] sm:$0xff]
        %v272 = vld [vmem:[%s255 + $0x70] sm:$0xff]
        %v273 = vld [vmem:[%s255 + $0x78] sm:$0xff]
        %v274 = vld [vmem:[%s2] sm:$0xff]
        %v275 = vld [vmem:[%s2 + $0x8] sm:$0xff]
        %v276 = vld [vmem:[%s2 + $0x10] sm:$0xff]
        %v277 = vld [vmem:[%s2 + $0x18] sm:$0xff]
        %v278 = vld [vmem:[%s2 + $0x20] sm:$0xff]
        %v279 = vld [vmem:[%s2 + $0x28] sm:$0xff]
        %v280 = vld [vmem:[%s2 + $0x30] sm:$0xff]
        %v281 = vld [vmem:[%s2 + $0x38] sm:$0xff]
        %vm282 = vcmask 523264
        %v284 = vsel %vm282, %v258, 0
        %v287 = vsel %vm282, %v259, 0
        %v290 = vsel %vm282, %v260, 0
        %v293 = vsel %vm282, %v261, 0
        %v296 = vsel %vm282, %v262, 0
        %v299 = vsel %vm282, %v263, 0
        %v302 = vsel %vm282, %v264, 0
        %v305 = vsel %vm282, %v265, 0
        %v308 = vsel %vm282, %v266, 0
        %v311 = vsel %vm282, %v267, 0
        %v314 = vsel %vm282, %v268, 0
        %v317 = vsel %vm282, %v269, 0
        %v320 = vsel %vm282, %v270, 0
        %v323 = vsel %vm282, %v271, 0
        %v326 = vsel %vm282, %v272, 0
        %v329 = vsel %vm282, %v273, 0
        %331 = vmatpush.msra.mxu0 0.0
        %332 = vmatpush.msra.mxu0 0.0
        %333 = vmatpush.msra.mxu0 0.0
        %334 = vmatpush.msra.mxu0 0.0
        %335 = vmatpush.msra.mxu0 0.0
        %336 = vmatpush.msra.mxu0 0.0
        %337 = vmatpush.msra.mxu0 0.0
        %338 = vmatpush.msra.mxu0 0.0
        %339 = vmatpush.msra.mxu0 %v281
        %340 = vmatpush.msra.mxu0 %v280
        %341 = vmatpush.msra.mxu0 %v279
        %342 = vmatpush.msra.mxu0 %v278
        %343 = vmatpush.msra.mxu0 %v277
        %344 = vmatpush.msra.mxu0 %v276
        %345 = vmatpush.msra.mxu0 %v275
        %346 = vmatpush.msra.mxu0 %v274
        %347 = vmatmul.f32.gmra.mxu0 %v284
        %v348 = vpop.f32.mrf.mxu0
        %v349 = vadd.f32 0.0, %v348
        %350 = vmatmul.f32.gmra.mxu0 %v287
        %v351 = vpop.f32.mrf.mxu0
        %v352 = vadd.f32 0.0, %v351
        %353 = vmatmul.f32.gmra.mxu0 %v290
        %v354 = vpop.f32.mrf.mxu0
        %v355 = vadd.f32 0.0, %v354
        %356 = vmatmul.f32.gmra.mxu0 %v293
        %v357 = vpop.f32.mrf.mxu0
        %v358 = vadd.f32 0.0, %v357
        %359 = vmatmul.f32.gmra.mxu0 %v296
        %v360 = vpop.f32.mrf.mxu0
        %v361 = vadd.f32 0.0, %v360
        %362 = vmatmul.f32.gmra.mxu0 %v299
        %v363 = vpop.f32.mrf.mxu0
        %v364 = vadd.f32 0.0, %v363
        %365 = vmatmul.f32.gmra.mxu0 %v302
        %v366 = vpop.f32.mrf.mxu0
        %v367 = vadd.f32 0.0, %v366
        %368 = vmatmul.f32.gmra.mxu0 %v305
        %v369 = vpop.f32.mrf.mxu0
        %v370 = vadd.f32 0.0, %v369
        %371 = vmatmul.f32.gmra.mxu0 %v308
        %v372 = vpop.f32.mrf.mxu0
        %v373 = vadd.f32 0.0, %v372
        %374 = vmatmul.f32.gmra.mxu0 %v311
        %v375 = vpop.f32.mrf.mxu0
        %v376 = vadd.f32 0.0, %v375
        %377 = vmatmul.f32.gmra.mxu0 %v314
        %v378 = vpop.f32.mrf.mxu0
        %v379 = vadd.f32 0.0, %v378
        %380 = vmatmul.f32.gmra.mxu0 %v317
        %v381 = vpop.f32.mrf.mxu0
        %v382 = vadd.f32 0.0, %v381
        %383 = vmatmul.f32.gmra.mxu0 %v320
        %v384 = vpop.f32.mrf.mxu0
        %v385 = vadd.f32 0.0, %v384
        %386 = vmatmul.f32.gmra.mxu0 %v323
        %v387 = vpop.f32.mrf.mxu0
        %v388 = vadd.f32 0.0, %v387
        %389 = vmatmul.f32.gmra.mxu0 %v326
        %v390 = vpop.f32.mrf.mxu0
        %v391 = vadd.f32 0.0, %v390
        %392 = vmatmul.f32.gmra.mxu0 %v329
        %v393 = vpop.f32.mrf.mxu0
        %v394 = vadd.f32 0.0, %v393
        %395 = vdwg.mxu0
        %p396 = scmp.eq.s32.totalorder %s26, 0
        // Predicated region
        $region41: #{tpu_custom_call.1} parent=35 // pred_check
          %p397 = pneg %p396
        $region42: #{tpu_custom_call.1} parent=35 // pred_check_branch
          %399 = sbr.rel (%p397) target = $region44
        $region43: #{tpu_custom_call.1} parent=35 // pred_region
          %v400 = vld [vmem:[%s3] sm:$0x1]
          %v402 = vperm.slane %v400, 0
          %404 = vst [vmem:[%s249] sm:$0xff] %v402
          %405 = vst [vmem:[%s249 + $0x8] sm:$0xff] %v402
          %406 = vst [vmem:[%s249 + $0x10] sm:$0xff] %v402
          %407 = vst [vmem:[%s249 + $0x18] sm:$0xff] %v402
          %408 = vst [vmem:[%s249 + $0x20] sm:$0xff] %v402
          %409 = vst [vmem:[%s249 + $0x28] sm:$0xff] %v402
          %410 = vst [vmem:[%s249 + $0x30] sm:$0xff] %v402
          %411 = vst [vmem:[%s249 + $0x38] sm:$0xff] %v402
          %412 = vst [vmem:[%s249 + $0x40] sm:$0xff] %v402
          %413 = vst [vmem:[%s249 + $0x48] sm:$0xff] %v402
          %414 = vst [vmem:[%s249 + $0x50] sm:$0xff] %v402
          %415 = vst [vmem:[%s249 + $0x58] sm:$0xff] %v402
          %416 = vst [vmem:[%s249 + $0x60] sm:$0xff] %v402
          %417 = vst [vmem:[%s249 + $0x68] sm:$0xff] %v402
          %418 = vst [vmem:[%s249 + $0x70] sm:$0xff] %v402
          %419 = vst [vmem:[%s249 + $0x78] sm:$0xff] %v402
        $region44: #{tpu_custom_call.1} parent=35 // pred_fallthru
          _
        %v420 = vld [vmem:[%s249] sm:$0xff]
        %v421 = vld [vmem:[%s249 + $0x8] sm:$0xff]
        %v422 = vld [vmem:[%s249 + $0x10] sm:$0xff]
        %v423 = vld [vmem:[%s249 + $0x18] sm:$0xff]
        %v424 = vld [vmem:[%s249 + $0x20] sm:$0xff]
        %v425 = vld [vmem:[%s249 + $0x28] sm:$0xff]
        %v426 = vld [vmem:[%s249 + $0x30] sm:$0xff]
        %v427 = vld [vmem:[%s249 + $0x38] sm:$0xff]
        %v428 = vld [vmem:[%s249 + $0x40] sm:$0xff]
        %v429 = vld [vmem:[%s249 + $0x48] sm:$0xff]
        %v430 = vld [vmem:[%s249 + $0x50] sm:$0xff]
        %v431 = vld [vmem:[%s249 + $0x58] sm:$0xff]
        %v432 = vld [vmem:[%s249 + $0x60] sm:$0xff]
        %v433 = vld [vmem:[%s249 + $0x68] sm:$0xff]
        %v434 = vld [vmem:[%s249 + $0x70] sm:$0xff]
        %v435 = vld [vmem:[%s249 + $0x78] sm:$0xff]
        %v436 = vld [vmem:[%s219] sm:$0xff]
        %v437 = vld [vmem:[%s219 + $0x8] sm:$0xff]
        %v438 = vld [vmem:[%s219 + $0x10] sm:$0xff]
        %v439 = vld [vmem:[%s219 + $0x18] sm:$0xff]
        %v440 = vld [vmem:[%s219 + $0x20] sm:$0xff]
        %v441 = vld [vmem:[%s219 + $0x28] sm:$0xff]
        %v442 = vld [vmem:[%s219 + $0x30] sm:$0xff]
        %v443 = vld [vmem:[%s219 + $0x38] sm:$0xff]
        %v444 = vld [vmem:[%s219 + $0x40] sm:$0xff]
        %v445 = vld [vmem:[%s219 + $0x48] sm:$0xff]
        %v446 = vld [vmem:[%s219 + $0x50] sm:$0xff]
        %v447 = vld [vmem:[%s219 + $0x58] sm:$0xff]
        %v448 = vld [vmem:[%s219 + $0x60] sm:$0xff]
        %v449 = vld [vmem:[%s219 + $0x68] sm:$0xff]
        %v450 = vld [vmem:[%s219 + $0x70] sm:$0xff]
        %v451 = vld [vmem:[%s219 + $0x78] sm:$0xff]
        %452 = vmatpush.msra.mxu0 %v394
        %453 = vmatpush.msra.mxu0 %v391
        %454 = vmatpush.msra.mxu0 %v388
        %455 = vmatpush.msra.mxu0 %v385
        %456 = vmatpush.msra.mxu0 %v382
        %457 = vmatpush.msra.mxu0 %v379
        %458 = vmatpush.msra.mxu0 %v376
        %459 = vmatpush.msra.mxu0 %v373
        %460 = vmatpush.msra.mxu0 %v370
        %461 = vmatpush.msra.mxu0 %v367
        %462 = vmatpush.msra.mxu0 %v364
        %463 = vmatpush.msra.mxu0 %v361
        %464 = vmatpush.msra.mxu0 %v358
        %465 = vmatpush.msra.mxu0 %v355
        %466 = vmatpush.msra.mxu0 %v352
        %467 = vmatpush.msra.mxu0 %v349
        %468 = vmatmul.f32.gmra.mxu0 %v436
        %v469 = vpop.f32.mrf.mxu0
        %v470 = vadd.f32 0.0, %v469
        %471 = vmatmul.f32.gmra.mxu0 %v437
        %v472 = vpop.f32.mrf.mxu0
        %v473 = vadd.f32 0.0, %v472
        %474 = vmatmul.f32.gmra.mxu0 %v438
        %v475 = vpop.f32.mrf.mxu0
        %v476 = vadd.f32 0.0, %v475
        %477 = vmatmul.f32.gmra.mxu0 %v439
        %v478 = vpop.f32.mrf.mxu0
        %v479 = vadd.f32 0.0, %v478
        %480 = vmatmul.f32.gmra.mxu0 %v440
        %v481 = vpop.f32.mrf.mxu0
        %v482 = vadd.f32 0.0, %v481
        %483 = vmatmul.f32.gmra.mxu0 %v441
        %v484 = vpop.f32.mrf.mxu0
        %v485 = vadd.f32 0.0, %v484
        %486 = vmatmul.f32.gmra.mxu0 %v442
        %v487 = vpop.f32.mrf.mxu0
        %v488 = vadd.f32 0.0, %v487
        %489 = vmatmul.f32.gmra.mxu0 %v443
        %v490 = vpop.f32.mrf.mxu0
        %v491 = vadd.f32 0.0, %v490
        %492 = vmatmul.f32.gmra.mxu0 %v444
        %v493 = vpop.f32.mrf.mxu0
        %v494 = vadd.f32 0.0, %v493
        %495 = vmatmul.f32.gmra.mxu0 %v445
        %v496 = vpop.f32.mrf.mxu0
        %v497 = vadd.f32 0.0, %v496
        %498 = vmatmul.f32.gmra.mxu0 %v446
        %v499 = vpop.f32.mrf.mxu0
        %v500 = vadd.f32 0.0, %v499
        %501 = vmatmul.f32.gmra.mxu0 %v447
        %v502 = vpop.f32.mrf.mxu0
        %v503 = vadd.f32 0.0, %v502
        %504 = vmatmul.f32.gmra.mxu0 %v448
        %v505 = vpop.f32.mrf.mxu0
        %v506 = vadd.f32 0.0, %v505
        %507 = vmatmul.f32.gmra.mxu0 %v449
        %v508 = vpop.f32.mrf.mxu0
        %v509 = vadd.f32 0.0, %v508
        %510 = vmatmul.f32.gmra.mxu0 %v450
        %v511 = vpop.f32.mrf.mxu0
        %v512 = vadd.f32 0.0, %v511
        %513 = vmatmul.f32.gmra.mxu0 %v451
        %v514 = vpop.f32.mrf.mxu0
        %v515 = vadd.f32 0.0, %v514
        %516 = vdwg.mxu0
        %v517 = vadd.f32 %v420, %v470
        %v518 = vadd.f32 %v421, %v473
        %v519 = vadd.f32 %v422, %v476
        %v520 = vadd.f32 %v423, %v479
        %v521 = vadd.f32 %v424, %v482
        %v522 = vadd.f32 %v425, %v485
        %v523 = vadd.f32 %v426, %v488
        %v524 = vadd.f32 %v427, %v491
        %v525 = vadd.f32 %v428, %v494
        %v526 = vadd.f32 %v429, %v497
        %v527 = vadd.f32 %v430, %v500
        %v528 = vadd.f32 %v431, %v503
        %v529 = vadd.f32 %v432, %v506
        %v530 = vadd.f32 %v433, %v509
        %v531 = vadd.f32 %v434, %v512
        %v532 = vadd.f32 %v435, %v515
        %533 = vst [vmem:[%s249] sm:$0xff] %v517
        %534 = vst [vmem:[%s249 + $0x8] sm:$0xff] %v518
        %535 = vst [vmem:[%s249 + $0x10] sm:$0xff] %v519
        %536 = vst [vmem:[%s249 + $0x18] sm:$0xff] %v520
        %537 = vst [vmem:[%s249 + $0x20] sm:$0xff] %v521
        %538 = vst [vmem:[%s249 + $0x28] sm:$0xff] %v522
        %539 = vst [vmem:[%s249 + $0x30] sm:$0xff] %v523
        %540 = vst [vmem:[%s249 + $0x38] sm:$0xff] %v524
        %541 = vst [vmem:[%s249 + $0x40] sm:$0xff] %v525
        %542 = vst [vmem:[%s249 + $0x48] sm:$0xff] %v526
        %543 = vst [vmem:[%s249 + $0x50] sm:$0xff] %v527
        %544 = vst [vmem:[%s249 + $0x58] sm:$0xff] %v528
        %545 = vst [vmem:[%s249 + $0x60] sm:$0xff] %v529
        %546 = vst [vmem:[%s249 + $0x68] sm:$0xff] %v530
        %547 = vst [vmem:[%s249 + $0x70] sm:$0xff] %v531
        %548 = vst [vmem:[%s249 + $0x78] sm:$0xff] %v532
        %s549 = sand.u32 %s137, 1
        %s550 = scalar_lea.sflag [#allocation4], %s549
        %s551 = sand.u32 %s137, 1
        %s552 = smul.addr %s551, 128
        %s553 = scalar_lea.vmem [#allocation5], %s552
        // Predicated region
        $region45: #{tpu_custom_call.1} parent=35 // pred_check
          %p554 = pneg %p147
        $region46: #{tpu_custom_call.1} parent=35 // pred_check_branch
          %556 = sbr.rel (%p554) target = $region48
        $region47: #{tpu_custom_call.1} parent=35 // pred_region
          %s557 = smul.u32 16, %s25
          %559 = vsyncadd %s550, 0
          %s560 = smul.addr %s557, 8
          %s561 = scalar_lea.hbm %s4, %s560
          %s562 = sshll.u32 %s553, 4
          %s563 = int_to_ptr.vmem [resolvable:$true] %s562
          %s564 = sshll.u32 %s561, 4
          %s565 = int_to_ptr.hbm [resolvable:$true] %s564
          %570 = dma.vmem_to_hbm [thread:$0]  %s563, 2048, %s565, %s550, 128, 128, 8
        $region48: #{tpu_custom_call.1} parent=35 // pred_fallthru
          _
      $region36: #{tpu_custom_call.1} parent=5 // pred_fallthru
        _
      %p571 = scmp.le.s32.totalorder 2, %s16
      // Predicated region
      $region49: #{tpu_custom_call.1} parent=5 // pred_check
        %p572 = pneg %p571
      $region50: #{tpu_custom_call.1} parent=5 // pred_check_branch
        %574 = sbr.rel (%p572) target = $region52
      $region51: #{tpu_custom_call.1} parent=5 // pred_region
        %s575 = ssub.s32 %s16, 2
        // Predicated region
        $region53: #{tpu_custom_call.1} parent=51 // pred_check
          %p576 = pneg %p153
        $region54: #{tpu_custom_call.1} parent=51 // pred_check_branch
          %578 = sbr.rel (%p576) target = $region56
        $region55: #{tpu_custom_call.1} parent=51 // pred_region
          %s579 = sand.u32 %s138, 1
          %s580 = scalar_lea.sflag [#allocation4], %s579
          %s581 = sand.u32 %s138, 1
          %s582 = smul.addr %s581, 128
          %s583 = scalar_lea.vmem [#allocation5], %s582
          %585 = dma.done %s580, 2048
        $region56: #{tpu_custom_call.1} parent=51 // pred_fallthru
          _
      $region52: #{tpu_custom_call.1} parent=5 // pred_fallthru
        _
    $region6: #{tpu_custom_call.1} parent=1 // loop_footer
      %s20 = sadd.s32 1, %s16
    $region7: #{tpu_custom_call.1} parent=1 // loop_footer_branch
      %15 = sbr.rel target = $region3
    $region8: #{tpu_custom_call.1} parent=1 // loop_exit
      _
    %586 = vsyncpa [#allocation3], 1
    %s587 = scalar_lea.sflag [#allocation3], 1
    %588 = vsyncpa %s587, 1
    %589 = vsyncpa [#allocation4], 1
    %s590 = scalar_lea.sflag [#allocation4], 1
    %591 = vsyncpa %s590, 1

</llo_original>
